<compile_context>
chip_gen: v7x
topology: tpu7x:2x2x1
jax: 0.10.0
libtpu: 0.0.40
codegen_flags: <defaults>
</compile_context>

<pallas_src>
import functools

import jax
import jax.numpy as jnp
from jax.experimental import pallas as pl
from jax.experimental.pallas import tpu as pltpu


# ---------------------------------------------------------------------------
# Tile-size / VMEM helpers
# ---------------------------------------------------------------------------

def _vmem_capacity_bytes():
    try:
        return int(pltpu.get_tpu_info().vmem_capacity_bytes)
    except Exception:
        return 64 * 1024 * 1024          # v7x lower bound


def _vmem_limit_bytes():
    # >= the default scoped limit on v5e (16 MiB), safe on v7x (64 MiB phys).
    return min(_vmem_capacity_bytes() // 2, 32 * 1024 * 1024)


def _default_target_tile_bytes():
    # ~2 MiB logits tiles amortize the ~0.35 us/step overhead and stay far
    # below the double-buffered VMEM budget on v5e / v6e / v7x.
    return max(256 * 1024, min(2 * 1024 * 1024, _vmem_capacity_bytes() // 16))


def _spatial_tiles(n, c, s, itemsize, target_bytes):
    """Pick (batch_block, spatial_block) for the (N, C, S) layout by bytes."""
    bytes_per_image = c * s * itemsize
    if bytes_per_image >= target_bytes:
        bn = 1
        ts = max(128, (target_bytes // max(1, c * itemsize)) // 128 * 128)
        ts = min(ts, ((s + 127) // 128) * 128)
    else:
        ts = s                                     # whole image per block
        bn = max(1, min(n, target_bytes // max(1, bytes_per_image)))
        bn = min(bn, max(1, n // 2))               # keep >=2 parallel blocks
        while n % bn:                              # keep bn a divisor of N
            bn -= 1
    return bn, ts


def _row_tile(n_rows, c, itemsize, target_bytes):
    """Row tile for the (N, C) layout; dtype-aware sublane rounding."""
    if itemsize >= 4:
        sub = 8
    elif itemsize == 2:
        sub = 16
    else:
        sub = 32
    tm = max(sub, (target_bytes // max(1, c * itemsize)) // sub * sub)
    tm = min(tm, ((n_rows + sub - 1) // sub) * sub)
    return tm


def _alpha_vector(alpha, n_classes):
    if alpha is None:
        return None
    if isinstance(alpha, (float, int)):
        vals = [float(alpha), 1.0 - float(alpha)]
    else:
        vals = [float(v) for v in alpha]
    # TODO(synk): PyTorch raises if a target index exceeds len(alpha); short
    # alpha vectors are padded with 1.0 here instead of erroring.
    vals = vals + [1.0] * max(0, n_classes - len(vals))
    return jnp.asarray(vals[:n_classes], dtype=jnp.float32)


def _focal_weight(one_m_pt, gamma):
    if gamma == 2.0:
        return one_m_pt * one_m_pt
    if gamma == 1.0:
        return one_m_pt
    if gamma == 0.0:
        return jnp.ones_like(one_m_pt)
    return jnp.power(jnp.maximum(one_m_pt, 0.0), gamma)


# ---------------------------------------------------------------------------
# Kernel A: native (N, C, S) layout, spatial on the lane axis (ndim > 2 path)
# ---------------------------------------------------------------------------

def _focal_spatial_kernel(x_ref, t_ref, *refs, gamma, has_alpha, s_total, ts,
                          mask_last):
    """x_ref (bn, C, ts) logits, t_ref (bn, 1, ts) targets, optional alpha
    (1, C, 1); o_ref (bn, 1, ts) holds lane-dense partial sums accumulated
    across the inner (spatial) grid axis."""
    if has_alpha:
        a_ref, o_ref = refs
    else:
        a_ref = None
        (o_ref,) = refs

    j = pl.program_id(1)

    @pl.when(j == 0)
    def _():
        o_ref[...] = jnp.zeros_like(o_ref)

    x = x_ref[...].astype(jnp.float32)                     # (bn, C, ts)
    t = t_ref[...]                                         # (bn, 1, ts) int32

    # Numerically stable log-softmax over the class (sublane) axis.
    m = jnp.max(x, axis=1, keepdims=True)                  # (bn, 1, ts)
    z = x - m
    lse = jnp.log(jnp.sum(jnp.exp(z), axis=1, keepdims=True))

    # One-hot gather of the target class via compare + sublane reduction.
    cls = jax.lax.broadcasted_iota(jnp.int32, z.shape, 1)  # (bn, C, ts)
    onehot = (cls == t).astype(jnp.float32)
    logpt = jnp.sum(z * onehot, axis=1, keepdims=True) - lse   # (bn, 1, ts)

    pt = jnp.exp(logpt)                                    # pt from UNSCALED logpt
    if has_alpha:
        at = jnp.sum(a_ref[...].astype(jnp.float32) * onehot, axis=1,
                     keepdims=True)
        logpt = logpt * at

    loss = -(_focal_weight(1.0 - pt, gamma) * logpt)       # (bn, 1, ts)

    if mask_last:
        last = pl.num_programs(1) - 1

        @pl.when(j < last)
        def _():
            o_ref[...] += loss

        @pl.when(j == last)
        def _():
            lane = jax.lax.broadcasted_iota(jnp.int32, loss.shape, 2) + j * ts
            o_ref[...] += jnp.where(lane < s_total, loss, 0.0)
    else:
        o_ref[...] += loss


def _focal_spatial_call(x3, t3, alpha_vec, gamma, target_bytes):
    n, c, s = (int(d) for d in x3.shape)
    itemsize = x3.dtype.itemsize
    bn, ts = _spatial_tiles(n, c, s, itemsize, target_bytes)
    n_outer = n // bn
    n_inner = (s + ts - 1) // ts
    mask_last = (s % ts) != 0
    has_alpha = alpha_vec is not None

    kernel = functools.partial(
        _focal_spatial_kernel, gamma=float(gamma), has_alpha=has_alpha,
        s_total=s, ts=ts, mask_last=mask_last)

    in_specs = [
        pl.BlockSpec((bn, c, ts), lambda i, j: (i, 0, j)),   # logits
        pl.BlockSpec((bn, 1, ts), lambda i, j: (i, 0, j)),   # targets
    ]
    args = [x3, t3]
    if has_alpha:
        in_specs.append(pl.BlockSpec((1, c, 1), lambda i, j: (0, 0, 0)))
        args.append(alpha_vec.reshape(1, c, 1))

    cost = pl.CostEstimate(
        flops=int(n * s * (6 * c + 12)),
        transcendentals=int(n * s * (c + 2)),
        bytes_accessed=int(x3.size * itemsize + t3.size * 4 + n * ts * 4),
    )

    return pl.pallas_call(
        kernel,
        out_shape=jax.ShapeDtypeStruct((n, 1, ts), jnp.float32),
        grid=(n_outer, n_inner),
        in_specs=in_specs,
        out_specs=pl.BlockSpec((bn, 1, ts), lambda i, j: (i, 0, 0)),
        compiler_params=pltpu.CompilerParams(
            dimension_semantics=("parallel", "arbitrary"),
            vmem_limit_bytes=_vmem_limit_bytes()),
        cost_estimate=cost,
    )(*args)


# ---------------------------------------------------------------------------
# Kernel B: 2-D (N, C) layout, row-tiled, fully parallel grid
# ---------------------------------------------------------------------------

def _focal_rows_kernel(x_ref, t_ref, *refs, gamma, has_alpha, n_rows, tm,
                       mask_last):
    """x_ref (tm, C) logits, t_ref (tm, 1) targets, optional alpha (1, C);
    o_ref (1, 1, 1) gets this tile's partial loss sum."""
    if has_alpha:
        a_ref, o_ref = refs
    else:
        a_ref = None
        (o_ref,) = refs

    i = pl.program_id(0)

    x = x_ref[...].astype(jnp.float32)                     # (tm, C)
    t = t_ref[...]                                         # (tm, 1) int32

    m = jnp.max(x, axis=-1, keepdims=True)
    z = x - m
    lse = jnp.log(jnp.sum(jnp.exp(z), axis=-1, keepdims=True))
    col = jax.lax.broadcasted_iota(jnp.int32, z.shape, 1)
    onehot = (col == t).astype(jnp.float32)
    logpt = jnp.sum(z * onehot, axis=-1, keepdims=True) - lse   # (tm, 1)

    pt = jnp.exp(logpt)
    if has_alpha:
        at = jnp.sum(a_ref[...].astype(jnp.float32) * onehot, axis=-1,
                     keepdims=True)
        logpt = logpt * at

    loss = -(_focal_weight(1.0 - pt, gamma) * logpt)       # (tm, 1)

    if mask_last:
        last = pl.num_programs(0) - 1

        @pl.when(i < last)
        def _():
            o_ref[...] = jnp.sum(loss).reshape(1, 1, 1)

        @pl.when(i == last)
        def _():
            row = jax.lax.broadcasted_iota(jnp.int32, loss.shape, 0) + i * tm
            o_ref[...] = jnp.sum(jnp.where(row < n_rows, loss, 0.0)).reshape(1, 1, 1)
    else:
        o_ref[...] = jnp.sum(loss).reshape(1, 1, 1)


def _focal_rows_call(x2, t2, alpha_vec, gamma, target_bytes):
    n_rows, c = (int(d) for d in x2.shape)
    itemsize = x2.dtype.itemsize
    tm = _row_tile(n_rows, c, itemsize, target_bytes)
    nb = (n_rows + tm - 1) // tm
    mask_last = (n_rows % tm) != 0
    has_alpha = alpha_vec is not None

    kernel = functools.partial(
        _focal_rows_kernel, gamma=float(gamma), has_alpha=has_alpha,
        n_rows=n_rows, tm=tm, mask_last=mask_last)

    in_specs = [
        pl.BlockSpec((tm, c), lambda i: (i, 0)),            # logits
        pl.BlockSpec((tm, 1), lambda i: (i, 0)),            # targets
    ]
    args = [x2, t2]
    if has_alpha:
        in_specs.append(pl.BlockSpec((1, c), lambda i: (0, 0)))
        args.append(alpha_vec.reshape(1, c))

    cost = pl.CostEstimate(
        flops=int(n_rows * (6 * c + 12)),
        transcendentals=int(n_rows * (c + 2)),
        bytes_accessed=int(x2.size * itemsize + t2.size * 4 + nb * 4),
    )

    return pl.pallas_call(
        kernel,
        out_shape=jax.ShapeDtypeStruct((nb, 1, 1), jnp.float32),
        grid=(nb,),
        in_specs=in_specs,
        out_specs=pl.BlockSpec((1, 1, 1), lambda i: (i, 0, 0)),
        compiler_params=pltpu.CompilerParams(
            dimension_semantics=("parallel",),
            vmem_limit_bytes=_vmem_limit_bytes()),
        cost_estimate=cost,
    )(*args)


# ---------------------------------------------------------------------------
# Public wrapper mirroring FocalLoss(gamma, alpha, size_average).forward
# ---------------------------------------------------------------------------

def focal_loss(logits, targets, gamma=2.0, alpha=None, size_average=True,
               target_tile_bytes=None):
    if target_tile_bytes is None:
        target_tile_bytes = _default_target_tile_bytes()
    target_tile_bytes = int(target_tile_bytes)

    x = logits
    if x.ndim > 2:
        n, c = int(x.shape[0]), int(x.shape[1])
        s = 1
        for d in x.shape[2:]:
            s *= int(d)
        x3 = x.reshape(n, c, s)                     # layout-preserving, no transpose
        t3 = targets.reshape(n, 1, s).astype(jnp.int32)
        alpha_vec = _alpha_vector(alpha, c)
        partial = _focal_spatial_call(x3, t3, alpha_vec, gamma, target_tile_bytes)
        n_total = n * s
    else:
        x2 = x if x.ndim == 2 else x.reshape(1, -1)
        n_rows, c = int(x2.shape[0]), int(x2.shape[1])
        t2 = targets.reshape(-1, 1).astype(jnp.int32)
        alpha_vec = _alpha_vector(alpha, c)
        partial = _focal_rows_call(x2, t2, alpha_vec, gamma, target_tile_bytes)
        n_total = n_rows

    total = jnp.sum(partial)                        # tiny final reduce in XLA
    if size_average:
        return total / jnp.float32(n_total)
    return total


# ---------------------------------------------------------------------------
# Plain-JAX reference (mirrors the PyTorch forward) and tests
# ---------------------------------------------------------------------------

def _reference(logits, targets, gamma, alpha, size_average):
    x = logits
    c = int(x.shape[1])
    if x.ndim > 2:
        x = x.reshape(x.shape[0], c, -1)
        x = jnp.transpose(x, (0, 2, 1)).reshape(-1, c)
    t = targets.reshape(-1)
    logp = jax.nn.log_softmax(x, axis=1)
    logpt = jnp.take_along_axis(logp, t[:, None], axis=1)[:, 0]
    pt = jnp.exp(logpt)
    av = _alpha_vector(alpha, c)
    if av is not None:
        logpt = logpt * av[t]
    loss = -((1.0 - pt) ** gamma) * logpt
    return loss.mean() if size_average else loss.sum()


if __name__ == "__main__":
    key = jax.random.PRNGKey(0)
    k1, k2, k3, k4, k5, k6 = jax.random.split(key, 6)

    # Case 1: the module's motivating 4-D layout [B, C, H, W] + [B, H, W].
    B, C, H, W = 2, 4, 16, 16
    logits = jax.random.normal(k1, (B, C, H, W), dtype=jnp.float32)
    targets = jax.random.randint(k2, (B, H, W), 0, C, dtype=jnp.int32)
    out1 = jax.block_until_ready(focal_loss(logits, targets))
    ref1 = _reference(logits, targets, 2.0, None, True)
    assert jnp.allclose(out1, ref1, rtol=1e-5, atol=1e-5), (out1, ref1)

    # Case 2: odd spatial size + alpha list + sum reduction; a tiny tile budget
    # forces spatial tiling, inner-axis accumulation and last-block masking.
    H2 = W2 = 15
    alpha2 = [0.25, 0.75, 0.5, 1.0]
    logits2 = jax.random.normal(k3, (B, C, H2, W2), dtype=jnp.float32)
    targets2 = jax.random.randint(k4, (B, H2, W2), 0, C, dtype=jnp.int32)
    out2 = jax.block_until_ready(
        focal_loss(logits2, targets2, gamma=2.0, alpha=alpha2,
                   size_average=False, target_tile_bytes=2048))
    ref2 = _reference(logits2, targets2, 2.0, alpha2, False)
    assert jnp.allclose(out2, ref2, rtol=2e-5, atol=1e-4), (out2, ref2)

    # Case 3: plain 2-D [N, C] input, float alpha, fractional gamma, row count
    # not a multiple of the tile (exercises the row-tiled kernel + masking).
    N3, C3 = 37, 10
    logits3 = jax.random.normal(k5, (N3, C3), dtype=jnp.float32)
    targets3 = jax.random.randint(k6, (N3,), 0, C3, dtype=jnp.int32)
    out3 = jax.block_until_ready(
        focal_loss(logits3, targets3, gamma=1.5, alpha=0.25,
                   size_average=True, target_tile_bytes=512))
    ref3 = _reference(logits3, targets3, 1.5, 0.25, True)
    assert jnp.allclose(out3, ref3, rtol=1e-5, atol=1e-5), (out3, ref3)

    print("KERNEL_OK")
</pallas_src>

<mosaic_0001>
module attributes {stable_mosaic.version = 11 : i64} {
  func.func @_focal_spatial_kernel(%arg0: i32, %arg1: i32, %arg2: memref<1x4x256xf32, #tpu.memory_space<vmem>>, %arg3: memref<1x1x256xi32, #tpu.memory_space<vmem>>, %arg4: memref<1x1x256xf32, #tpu.memory_space<vmem>>) attributes {dimension_semantics = [#tpu.dimension_semantics<parallel>, #tpu.dimension_semantics<arbitrary>], iteration_bounds = array<i64: 2, 1>, scalar_prefetch = 0 : i64, scratch_operands = 0 : i64, tpu.core_type = #tpu.core_type<tc>, window_params = [{transform_indices = @transform_0, window_bounds = array<i64: 1, 4, 256>}, {transform_indices = @transform_1, window_bounds = array<i64: 1, 1, 256>}, {transform_indices = @transform_2, window_bounds = array<i64: 1, 1, 256>}]} {
    %c0_i32 = arith.constant 0 : i32
    %0 = arith.cmpi eq, %arg1, %c0_i32 : i32
    %1 = arith.extui %0 : i1 to i32
    %c0_i32_0 = arith.constant 0 : i32
    %2 = arith.cmpi ne, %1, %c0_i32_0 : i32
    scf.if %2 {
      %cst_16 = arith.constant 0.000000e+00 : f32
      %32 = vector.broadcast %cst_16 : f32 to vector<1x1x256xf32>
      %c0_17 = arith.constant 0 : index
      %c0_18 = arith.constant 0 : index
      %c0_19 = arith.constant 0 : index
      %33 = vector.load %arg4[%c0_17, %c0_18, %c0_19] : memref<1x1x256xf32, #tpu.memory_space<vmem>>, vector<1x1x256xf32>
      tpu.vector_store %arg4[%c0_17, %c0_18, %c0_19], %32 {strides = array<i32>} : memref<1x1x256xf32, #tpu.memory_space<vmem>>, vector<1x1x256xf32>,
    } else {
    }
    %c0 = arith.constant 0 : index
    %c0_1 = arith.constant 0 : index
    %c0_2 = arith.constant 0 : index
    %3 = vector.load %arg2[%c0, %c0_1, %c0_2] : memref<1x4x256xf32, #tpu.memory_space<vmem>>, vector<1x4x256xf32>
    %c0_3 = arith.constant 0 : index
    %c0_4 = arith.constant 0 : index
    %c0_5 = arith.constant 0 : index
    %4 = vector.load %arg3[%c0_3, %c0_4, %c0_5] : memref<1x1x256xi32, #tpu.memory_space<vmem>>, vector<1x1x256xi32>
    %cst = arith.constant dense<0xFF800000> : vector<1x256xf32>
    %5 = vector.multi_reduction <maximumf>, %3, %cst [1] : vector<1x4x256xf32> to vector<1x256xf32>
    %6 = vector.shape_cast %5 : vector<1x256xf32> to vector<1x1x256xf32>
    %7 = vector.broadcast %6 : vector<1x1x256xf32> to vector<1x4x256xf32>
    %8 = arith.subf %3, %7 : vector<1x4x256xf32>
    %9 = math.exp %8 : vector<1x4x256xf32>
    %cst_6 = arith.constant dense<0.000000e+00> : vector<1x256xf32>
    %10 = vector.multi_reduction <add>, %9, %cst_6 [1] : vector<1x4x256xf32> to vector<1x256xf32>
    %11 = vector.shape_cast %10 : vector<1x256xf32> to vector<1x1x256xf32>
    %12 = math.log %11 : vector<1x1x256xf32>
    %13 = tpu.iota {dimensions = array<i32: 1>} : vector<1x4x256xi32>
    %14 = vector.broadcast %4 : vector<1x1x256xi32> to vector<1x4x256xi32>
    %15 = arith.cmpi eq, %13, %14 : vector<1x4x256xi32>
    %16 = arith.extui %15 : vector<1x4x256xi1> to vector<1x4x256xi32>
    %17 = arith.sitofp %16 : vector<1x4x256xi32> to vector<1x4x256xf32>
    %18 = arith.mulf %8, %17 : vector<1x4x256xf32>
    %cst_7 = arith.constant dense<0.000000e+00> : vector<1x256xf32>
    %19 = vector.multi_reduction <add>, %18, %cst_7 [1] : vector<1x4x256xf32> to vector<1x256xf32>
    %20 = vector.shape_cast %19 : vector<1x256xf32> to vector<1x1x256xf32>
    %21 = arith.subf %20, %12 : vector<1x1x256xf32>
    %22 = math.exp %21 : vector<1x1x256xf32>
    %cst_8 = arith.constant 1.000000e+00 : f32
    %23 = vector.broadcast %cst_8 : f32 to vector<1x1x256xf32>
    %24 = arith.subf %23, %22 : vector<1x1x256xf32>
    %25 = arith.mulf %24, %24 : vector<1x1x256xf32>
    %26 = arith.mulf %25, %21 : vector<1x1x256xf32>
    %cst_9 = arith.constant 0.000000e+00 : f32
    %27 = vector.broadcast %cst_9 : f32 to vector<1x1x256xf32>
    %28 = arith.subf %27, %26 : vector<1x1x256xf32>
    %c0_10 = arith.constant 0 : index
    %c0_11 = arith.constant 0 : index
    %c0_12 = arith.constant 0 : index
    %29 = vector.load %arg4[%c0_10, %c0_11, %c0_12] : memref<1x1x256xf32, #tpu.memory_space<vmem>>, vector<1x1x256xf32>
    %30 = arith.addf %29, %28 : vector<1x1x256xf32>
    %c0_13 = arith.constant 0 : index
    %c0_14 = arith.constant 0 : index
    %c0_15 = arith.constant 0 : index
    %31 = vector.load %arg4[%c0_13, %c0_14, %c0_15] : memref<1x1x256xf32, #tpu.memory_space<vmem>>, vector<1x1x256xf32>
    tpu.vector_store %arg4[%c0_13, %c0_14, %c0_15], %30 {strides = array<i32>} : memref<1x1x256xf32, #tpu.memory_space<vmem>>, vector<1x1x256xf32>,
    return
  }
  func.func @transform_0(%arg0: i32, %arg1: i32) -> (i32, i32, i32) {
    %c0_i32 = arith.constant 0 : i32
    %c0_i32_0 = arith.constant 0 : i32
    return %arg0, %c0_i32, %arg1 : i32, i32, i32
  }
  func.func @transform_1(%arg0: i32, %arg1: i32) -> (i32, i32, i32) {
    %c0_i32 = arith.constant 0 : i32
    %c0_i32_0 = arith.constant 0 : i32
    return %arg0, %c0_i32, %arg1 : i32, i32, i32
  }
  func.func @transform_2(%arg0: i32, %arg1: i32) -> (i32, i32, i32) {
    %c0_i32 = arith.constant 0 : i32
    %c0_i32_0 = arith.constant 0 : i32
    %c0_i32_1 = arith.constant 0 : i32
    return %arg0, %c0_i32, %c0_i32_0 : i32, i32, i32
  }
}

</mosaic_0001>

<llo_original>
// kernel: tpu_custom_call.1
$region0: #{tpu_custom_call.1}
  #allocation0 [shape = 'u32[]', space=smem, size = 0x4, offset = 0x4, fixed_abs, tag = 'smem constant byte address 0x4 - core index']
  #allocation1 [shape = 'u32[144,128]{1,0:T(1,128)}', space=vmem, size = 0x12000, scoped, tag = 'internal scratch']
  %s0 = inlined_call_operand.hbm [shape: f32[2,4,256], index: 0, kind: input, shape index: {}]
  %s1 = inlined_call_operand.hbm [shape: s32[2,1,256], index: 1, kind: input, shape index: {}]
  %s2 = inlined_call_operand.hbm [shape: f32[2,1,256], index: 2, kind: output, shape index: {}]
  %s3 = sld [smem:[#allocation0]]
  $region53: #{tpu_custom_call.1} parent=0
    _
  %s5 = ssub.s32 1, %s3
  %s6 = scalar_select 0, %s5, %s3
  $region1: #{tpu_custom_call.1} parent=0
    #allocation2 [shape = 'u8[8192]{0}', space=vmem, size = 0x2000, scoped, tag = 'input window, operand 0']
    #allocation3 [shape = 's32[2]{0}', space=sflag, size = 0x8, scoped, tag = 'scoped memory for tpu_custom_call.1']
    #allocation4 [shape = 's32[2]{0}', space=sflag, size = 0x8, scoped, tag = 'scoped memory for tpu_custom_call.1']
    #allocation5 [shape = 'u8[2048]{0}', space=vmem, size = 0x800, scoped, tag = 'input window, operand 1']
    #allocation6 [shape = 's32[2]{0}', space=sflag, size = 0x8, scoped, tag = 'scoped memory for tpu_custom_call.1']
    #allocation7 [shape = 'u8[2048]{0}', space=vmem, size = 0x800, scoped, tag = 'output window, operand 0']
    %7 = vsyncpa [#allocation3], 0
    %s8 = scalar_lea.sflag [#allocation3], 1
    %9 = vsyncpa %s8, 0
    %10 = vsyncpa [#allocation6], 0
    %s11 = scalar_lea.sflag [#allocation6], 1
    %12 = vsyncpa %s11, 0
    %13 = vsyncpa [#allocation4], 0
    %s14 = scalar_lea.sflag [#allocation4], 1
    %15 = vsyncpa %s14, 0
    loop: start=0, step=1, limit=4
    $region2: #{tpu_custom_call.1} parent=1 // loop_pre_header
      _
    $region3: #{tpu_custom_call.1} parent=1 // loop_header
      %s17 = sphi 0, %s21
      %p18 = scmp.ge.s32.totalorder %s17, 4
      %s24 = sphi 0, %s36
      %s25 = sphi 0, %s32
      %s26 = sphi 0, %s24
      %s27 = sphi 0, %s25
      %s28 = sphi 0, %s26
      %s29 = sphi 0, %s27
      %s41 = sphi 0, %s43
      %s44 = sphi 0, %s41
      %s45 = sphi 0, %s44
      %s61 = sphi 0, %s45
      %s69 = sphi 0, %s71
      %s72 = sphi 0, %s69
      %s73 = sphi 0, %s72
      %s89 = sphi 0, %s73
      %s95 = sphi 0, %s97
      %s98 = sphi 0, %s95
      %s99 = sphi 0, %s98
      %s115 = sphi 0, %s99
    $region4: #{tpu_custom_call.1} parent=1 // loop_header_branch
      %20 = sbr.rel (%p18) target = $region8
    $region5: #{tpu_custom_call.1} parent=1 // loop_body
      %s22 = ssub.s32 %s17, 1
      %s23 = ssub.s32 %s17, 2
      %s30 = sadd.s32 1, %s25
      %p31 = scmp.ge.s32.totalorder %s30, 1
      %s32 = scalar_select %p31, 0, %s30
      %s33 = sadd.s32 1, %s24
      %s34 = scalar_select %p31, %s33, %s24
      %p35 = scmp.ge.s32.totalorder %s34, 2
      %s36 = scalar_select %p35, 0, %s34
      %s37 = ssub.s32 %s24, %s36
      %s38 = ssub.s32 %s25, %s32
      %s39 = sor.u32 %s37, %s38
      %p40 = scmp.eq.s32.totalorder %s39, 0
      %s42 = sadd.s32 %s41, 1
      %s43 = scalar_select %p40, %s41, %s42
      %p46 = pneg %p40
      %p47 = scmp.eq.s32.totalorder %s17, 1
      %p48 = por %p46, %p47
      %p49 = scmp.ne.s32.totalorder %s41, %s44
      %p50 = scmp.eq.s32.totalorder %s17, 0
      %p51 = por %p49, %p50
      %p52 = scmp.ne.s32.totalorder %s41, %s44
      %p53 = scmp.eq.s32.totalorder %s22, 1
      %p54 = por %p52, %p53
      %p55 = scmp.ne.s32.totalorder %s44, %s45
      %p56 = scmp.eq.s32.totalorder %s22, 0
      %p57 = por %p55, %p56
      %p58 = scmp.ne.s32.totalorder %s44, %s45
      %p59 = scmp.eq.s32.totalorder %s23, 1
      %p60 = por %p58, %p59
      %p62 = scmp.ne.s32.totalorder %s45, %s61
      %p63 = scmp.eq.s32.totalorder %s23, 0
      %p64 = por %p62, %p63
      %s65 = ssub.s32 %s24, %s36
      %s66 = ssub.s32 %s25, %s32
      %s67 = sor.u32 %s65, %s66
      %p68 = scmp.eq.s32.totalorder %s67, 0
      %s70 = sadd.s32 %s69, 1
      %s71 = scalar_select %p68, %s69, %s70
      %p74 = pneg %p68
      %p75 = scmp.eq.s32.totalorder %s17, 1
      %p76 = por %p74, %p75
      %p77 = scmp.ne.s32.totalorder %s69, %s72
      %p78 = scmp.eq.s32.totalorder %s17, 0
      %p79 = por %p77, %p78
      %p80 = scmp.ne.s32.totalorder %s69, %s72
      %p81 = scmp.eq.s32.totalorder %s22, 1
      %p82 = por %p80, %p81
      %p83 = scmp.ne.s32.totalorder %s72, %s73
      %p84 = scmp.eq.s32.totalorder %s22, 0
      %p85 = por %p83, %p84
      %p86 = scmp.ne.s32.totalorder %s72, %s73
      %p87 = scmp.eq.s32.totalorder %s23, 1
      %p88 = por %p86, %p87
      %p90 = scmp.ne.s32.totalorder %s73, %s89
      %p91 = scmp.eq.s32.totalorder %s23, 0
      %p92 = por %p90, %p91
      %s93 = ssub.s32 %s24, %s36
      %p94 = scmp.eq.s32.totalorder %s93, 0
      %s96 = sadd.s32 %s95, 1
      %s97 = scalar_select %p94, %s95, %s96
      %p100 = pneg %p94
      %p101 = scmp.eq.s32.totalorder %s17, 1
      %p102 = por %p100, %p101
      %p103 = scmp.ne.s32.totalorder %s95, %s98
      %p104 = scmp.eq.s32.totalorder %s17, 0
      %p105 = por %p103, %p104
      %p106 = scmp.ne.s32.totalorder %s95, %s98
      %p107 = scmp.eq.s32.totalorder %s22, 1
      %p108 = por %p106, %p107
      %p109 = scmp.ne.s32.totalorder %s98, %s99
      %p110 = scmp.eq.s32.totalorder %s22, 0
      %p111 = por %p109, %p110
      %p112 = scmp.ne.s32.totalorder %s98, %s99
      %p113 = scmp.eq.s32.totalorder %s23, 1
      %p114 = por %p112, %p113
      %p116 = scmp.ne.s32.totalorder %s99, %s115
      %p117 = scmp.eq.s32.totalorder %s23, 0
      %p118 = por %p116, %p117
      %p119 = scmp.le.s32.totalorder 1, %s17
      %p120 = scmp.lt.s32.totalorder %s17, 3
      %p121 = pnand %p119, %p120
      %p122 = pneg %p121
      // Predicated region
      $region9: #{tpu_custom_call.1} parent=5 // pred_check
        _
      $region10: #{tpu_custom_call.1} parent=5 // pred_check_branch
        %124 = sbr.rel (%p121) target = $region12
      $region11: #{tpu_custom_call.1} parent=5 // pred_region
        %s125 = ssub.s32 %s17, 1
      $region12: #{tpu_custom_call.1} parent=5 // pred_fallthru
        _
      %p126 = scmp.lt.s32.totalorder %s17, 2
      // Predicated region
      $region13: #{tpu_custom_call.1} parent=5 // pred_check
        %p127 = pneg %p126
      $region14: #{tpu_custom_call.1} parent=5 // pred_check_branch
        %129 = sbr.rel (%p127) target = $region16
      $region15: #{tpu_custom_call.1} parent=5 // pred_region
        // Predicated region
        $region17: #{tpu_custom_call.1} parent=15 // pred_check
          %p130 = pneg %p51
        $region18: #{tpu_custom_call.1} parent=15 // pred_check_branch
          %132 = sbr.rel (%p130) target = $region20
        $region19: #{tpu_custom_call.1} parent=15 // pred_region
          %s133 = sand.u32 %s41, 1
          %s134 = scalar_lea.sflag [#allocation3], %s133
          %s135 = sand.u32 %s41, 1
          %s136 = smul.addr %s135, 8
          %s137 = scalar_lea.vmem [#allocation2], %s136
          %s138 = smul.u32 2, %s25
          %s140 = ssub.s32 128, 128
          %141 = vsyncadd %s134, %s140
          %s142 = smul.addr %s24, 2
          %s143 = sadd.s32 %s138, %s142
          %s144 = smul.addr %s143, 64
          %s145 = scalar_lea.hbm %s0, %s144
          %s147 = sshll.u32 %s137, 4
          %s148 = int_to_ptr.vmem [resolvable:$true] %s147
          %150 = dma.hbm_to_vmem [thread:$0]  %s145, 128, %s148, %s134
        $region20: #{tpu_custom_call.1} parent=15 // pred_fallthru
          _
        // Predicated region
        $region21: #{tpu_custom_call.1} parent=15 // pred_check
          %p151 = pneg %p79
        $region22: #{tpu_custom_call.1} parent=15 // pred_check_branch
          %153 = sbr.rel (%p151) target = $region24
        $region23: #{tpu_custom_call.1} parent=15 // pred_region
          %s154 = sand.u32 %s69, 1
          %s155 = scalar_lea.sflag [#allocation6], %s154
          %s156 = sand.u32 %s69, 1
          %s157 = smul.addr %s156, 2
          %s158 = scalar_lea.vmem [#allocation5], %s157
          %s159 = smul.u32 2, %s25
          %s161 = ssub.s32 32, 32
          %162 = vsyncadd %s155, %s161
          %s163 = smul.addr %s24, 2
          %s164 = sadd.s32 %s159, %s163
          %s165 = smul.addr %s164, 16
          %s166 = scalar_lea.hbm %s1, %s165
          %s168 = sshll.u32 %s158, 4
          %s169 = int_to_ptr.vmem [resolvable:$true] %s168
          %171 = dma.hbm_to_vmem [thread:$0]  %s166, 32, %s169, %s155
        $region24: #{tpu_custom_call.1} parent=15 // pred_fallthru
          _
      $region16: #{tpu_custom_call.1} parent=5 // pred_fallthru
        _
      %p172 = scmp.le.s32.totalorder 1, %s17
      %p173 = scmp.lt.s32.totalorder %s17, 3
      %p174 = pnand %p172, %p173
      %p175 = pneg %p174
      // Predicated region
      $region25: #{tpu_custom_call.1} parent=5 // pred_check
        _
      $region26: #{tpu_custom_call.1} parent=5 // pred_check_branch
        %177 = sbr.rel (%p174) target = $region28
      $region27: #{tpu_custom_call.1} parent=5 // pred_region
        %s178 = ssub.s32 %s17, 1
        %s179 = sand.u32 %s44, 1
        %s180 = scalar_lea.sflag [#allocation3], %s179
        %s181 = sand.u32 %s44, 1
        %s182 = smul.addr %s181, 8
        %s183 = scalar_lea.vmem [#allocation2], %s182
        // Predicated region
        $region29: #{tpu_custom_call.1} parent=27 // pred_check
          %p184 = pneg %p57
        $region30: #{tpu_custom_call.1} parent=27 // pred_check_branch
          %186 = sbr.rel (%p184) target = $region32
        $region31: #{tpu_custom_call.1} parent=27 // pred_region
          %187 = dma.done %s180, 128
        $region32: #{tpu_custom_call.1} parent=27 // pred_fallthru
          _
        %s188 = sand.u32 %s72, 1
        %s189 = scalar_lea.sflag [#allocation6], %s188
        %s190 = sand.u32 %s72, 1
        %s191 = smul.addr %s190, 2
        %s192 = scalar_lea.vmem [#allocation5], %s191
        // Predicated region
        $region33: #{tpu_custom_call.1} parent=27 // pred_check
          %p193 = pneg %p85
        $region34: #{tpu_custom_call.1} parent=27 // pred_check_branch
          %195 = sbr.rel (%p193) target = $region36
        $region35: #{tpu_custom_call.1} parent=27 // pred_region
          %196 = dma.done %s189, 32
        $region36: #{tpu_custom_call.1} parent=27 // pred_fallthru
          _
        %s197 = sand.u32 %s44, 1
        %s198 = scalar_lea.sflag [#allocation3], %s197
        %s199 = sand.u32 %s44, 1
        %s200 = smul.addr %s199, 8
        %s201 = scalar_lea.vmem [#allocation2], %s200
        %p202 = pneg %p57
        %p203 = pneg %p54
        %s204 = sand.u32 %s72, 1
        %s205 = scalar_lea.sflag [#allocation6], %s204
        %s206 = sand.u32 %s72, 1
        %s207 = smul.addr %s206, 2
        %s208 = scalar_lea.vmem [#allocation5], %s207
        %p209 = pneg %p85
        %p210 = pneg %p82
        %p211 = pneg %p111
        %p212 = pneg %p108
        %s213 = sand.u32 %s98, 1
        %s214 = scalar_lea.sflag [#allocation4], %s213
        %s215 = sand.u32 %s98, 1
        %s216 = smul.addr %s215, 2
        %s217 = scalar_lea.vmem [#allocation7], %s216
        %s218 = smul.u32 2, %s27
        %s219 = smul.u32 2, %s27
        %p220 = scmp.eq.s32.totalorder %s27, 0
        // Predicated region
        $region37: #{tpu_custom_call.1} parent=27 // pred_check
          %p221 = pneg %p220
        $region38: #{tpu_custom_call.1} parent=27 // pred_check_branch
          %223 = sbr.rel (%p221) target = $region40
        $region39: #{tpu_custom_call.1} parent=27 // pred_region
          %v224 = vlaneseq
          %vm225 = vcmp.ge.s32.totalorder %v224, 0
          %vm226 = vcmp.lt.s32.totalorder %v224, 256
          %vm227 = vmand %vm225, %vm226
          %228 = vst.msk [vmem:[%s217] sm:$0x3] %vm227, 0.0
        $region40: #{tpu_custom_call.1} parent=27 // pred_fallthru
          _
        %v229 = vld [vmem:[%s183] sm:$0xff]
        %v230 = vld [vmem:[%s192] sm:$0x3]
        %v232 = vcombine.high %v229, %v229
        %vm234 = vcmask 1043456
        %v235 = vsel %vm234, %v229, -inf
        %v236 = vrot.slane %v235, 4
        %v237 = vmax.f32 %v235, %v236
        %v238 = vrot.slane %v237, 2
        %v239 = vmax.f32 %v237, %v238
        %v240 = vrot.slane %v239, 1
        %v241 = vmax.f32 %v239, %v240
        %v242 = vsel %vm234, %v232, -inf
        %v243 = vrot.slane %v242, 4
        %v244 = vmax.f32 %v242, %v243
        %v245 = vrot.slane %v244, 2
        %v246 = vmax.f32 %v244, %v245
        %v247 = vrot.slane %v246, 1
        %v248 = vmax.f32 %v246, %v247
        %v251 = vcombine.low %v241, %v248
        %v253 = vsub.f32 %v229, %v251
        %v254 = vmul.f32 %v253, 1.442695
        %v255 = vpow.pop %v254
        %v257 = vcombine.high %v255, %v255
        %v259 = vsel %vm234, %v255, 0.0
        %v260 = vrot.slane %v259, 4
        %v261 = vadd.f32 %v259, %v260
        %v262 = vrot.slane %v261, 2
        %v263 = vadd.f32 %v261, %v262
        %v264 = vrot.slane %v263, 1
        %v265 = vadd.f32 %v263, %v264
        %v266 = vsel %vm234, %v257, 0.0
        %v267 = vrot.slane %v266, 4
        %v268 = vadd.f32 %v266, %v267
        %v269 = vrot.slane %v268, 2
        %v270 = vadd.f32 %v268, %v269
        %v271 = vrot.slane %v270, 1
        %v272 = vadd.f32 %v270, %v271
        %v273 = vlog2.pop %v265
        %v274 = vmul.f32 %v273, 0.6931472
        %v275 = vlog2.pop %v272
        %v276 = vmul.f32 %v275, 0.6931472
        %v277 = vlaneseq
        %v278 = vshrl.u32 %v277, 7
        %v279 = vlaneseq
        %v280 = vshrl.u32 %v279, 7
        %v281 = vsub.s32 0, %v280
        %v282 = vrot.slane %v230, %v281
        %v283 = vlaneseq
        %v284 = vshrl.u32 %v283, 7
        %v285 = vsub.s32 1, %v284
        %v286 = vrot.slane %v230, %v285
        %vm287 = vcmp.eq.s32.totalorder %v278, %v282
        %vm288 = vcmp.eq.s32.totalorder %v278, %v286
        %v289 = vsel %vm287, 1, 0
        %v290 = vsel %vm288, 1, 0
        %v291 = vcvt.s32.f32 %v289
        %v292 = vcvt.s32.f32 %v290
        %v295 = vcombine.low %v291, %v292
        %v297 = vmul.f32 %v253, %v295
        %v299 = vcombine.high %v297, %v297
        %v301 = vsel %vm234, %v297, 0.0
        %v302 = vrot.slane %v301, 4
        %v303 = vadd.f32 %v301, %v302
        %v304 = vrot.slane %v303, 2
        %v305 = vadd.f32 %v303, %v304
        %v306 = vrot.slane %v305, 1
        %v307 = vadd.f32 %v305, %v306
        %v308 = vsel %vm234, %v299, 0.0
        %v309 = vrot.slane %v308, 4
        %v310 = vadd.f32 %v308, %v309
        %v311 = vrot.slane %v310, 2
        %v312 = vadd.f32 %v310, %v311
        %v313 = vrot.slane %v312, 1
        %v314 = vadd.f32 %v312, %v313
        %v315 = vsub.f32 %v307, %v274
        %v316 = vsub.f32 %v314, %v276
        %v317 = vmul.f32 %v315, 1.442695
        %v318 = vpow.pop %v317
        %v319 = vmul.f32 %v316, 1.442695
        %v320 = vpow.pop %v319
        %v321 = vsub.f32 1.0, %v318
        %v322 = vsub.f32 1.0, %v320
        %v323 = vmul.f32 %v321, %v321
        %v324 = vmul.f32 %v322, %v322
        %v325 = vmul.f32 %v323, %v315
        %v326 = vmul.f32 %v324, %v316
        %v327 = vsub.f32 0.0, %v325
        %v328 = vsub.f32 0.0, %v326
        %v329 = vld [vmem:[%s217] sm:$0x3]
        %v332 = vcombine.low %v327, %v328
        %v334 = vunpack.c.l.s4 1966171168
        %v335 = vunpack.c.0.s8 %v334
        %v336 = vlaneseq
        %v337 = vshrl.u32 %v336, 7
        %v338 = vsub.s32 %v335, %v337
        %v339 = vrot.slane %v332, %v338
        %v341 = vunpack.c.l.s4 1966171168
        %v342 = vunpack.c.0.s8 %v341
        %v343 = vlaneseq
        %v344 = vshrl.u32 %v343, 7
        %v345 = vsub.s32 %v342, %v344
        %v346 = vrot.slane %v339, %v345
        %v348 = vadd.f32 %v329, %v346
        %v349 = vlaneseq
        %vm350 = vcmp.ge.s32.totalorder %v349, 0
        %vm351 = vcmp.lt.s32.totalorder %v349, 256
        %vm352 = vmand %vm350, %vm351
        %353 = vst.msk [vmem:[%s217] sm:$0x3] %vm352, %v348
        %s354 = sand.u32 %s98, 1
        %s355 = scalar_lea.sflag [#allocation4], %s354
        %s356 = sand.u32 %s98, 1
        %s357 = smul.addr %s356, 2
        %s358 = scalar_lea.vmem [#allocation7], %s357
        // Predicated region
        $region41: #{tpu_custom_call.1} parent=27 // pred_check
          %p359 = pneg %p108
        $region42: #{tpu_custom_call.1} parent=27 // pred_check_branch
          %361 = sbr.rel (%p359) target = $region44
        $region43: #{tpu_custom_call.1} parent=27 // pred_region
          %s363 = ssub.s32 32, 32
          %364 = vsyncadd %s355, %s363
          %s365 = smul.addr %s26, 2
          %s366 = smul.addr %s365, 16
          %s367 = scalar_lea.hbm %s2, %s366
          %s369 = sshll.u32 %s358, 4
          %s370 = int_to_ptr.vmem [resolvable:$true] %s369
          %372 = dma.vmem_to_hbm [thread:$0]  %s370, 32, %s367, %s355
        $region44: #{tpu_custom_call.1} parent=27 // pred_fallthru
          _
      $region28: #{tpu_custom_call.1} parent=5 // pred_fallthru
        _
      %p373 = scmp.le.s32.totalorder 2, %s17
      // Predicated region
      $region45: #{tpu_custom_call.1} parent=5 // pred_check
        %p374 = pneg %p373
      $region46: #{tpu_custom_call.1} parent=5 // pred_check_branch
        %376 = sbr.rel (%p374) target = $region48
      $region47: #{tpu_custom_call.1} parent=5 // pred_region
        %s377 = ssub.s32 %s17, 2
        // Predicated region
        $region49: #{tpu_custom_call.1} parent=47 // pred_check
          %p378 = pneg %p114
        $region50: #{tpu_custom_call.1} parent=47 // pred_check_branch
          %380 = sbr.rel (%p378) target = $region52
        $region51: #{tpu_custom_call.1} parent=47 // pred_region
          %s381 = sand.u32 %s99, 1
          %s382 = scalar_lea.sflag [#allocation4], %s381
          %s383 = sand.u32 %s99, 1
          %s384 = smul.addr %s383, 2
          %s385 = scalar_lea.vmem [#allocation7], %s384
          %386 = dma.done %s382, 32
        $region52: #{tpu_custom_call.1} parent=47 // pred_fallthru
          _
      $region48: #{tpu_custom_call.1} parent=5 // pred_fallthru
        _
    $region6: #{tpu_custom_call.1} parent=1 // loop_footer
      %s21 = sadd.s32 1, %s17
    $region7: #{tpu_custom_call.1} parent=1 // loop_footer_branch
      %16 = sbr.rel target = $region3
    $region8: #{tpu_custom_call.1} parent=1 // loop_exit
      _
    %387 = vsyncpa [#allocation3], 1
    %s388 = scalar_lea.sflag [#allocation3], 1
    %389 = vsyncpa %s388, 1
    %390 = vsyncpa [#allocation6], 1
    %s391 = scalar_lea.sflag [#allocation6], 1
    %392 = vsyncpa %s391, 1
    %393 = vsyncpa [#allocation4], 1
    %s394 = scalar_lea.sflag [#allocation4], 1
    %395 = vsyncpa %s394, 1

</llo_original>
